<compile_context>
chip_gen: v6e
topology: v6e:2x2x1
jax: 0.10.0
libtpu: 0.0.40
codegen_flags: <defaults>
</compile_context>

<pallas_src>
import jax
import jax.numpy as jnp
from jax.experimental import pallas as pl
from jax.experimental.pallas import tpu as pltpu

# CIFAR10-Autoencoder-consistent synthetic dims (c*h*w = feature size).
C, H, W = 4, 8, 8
LATENT = 2
FEATURES = C * H * W  # 256 (multiple of 128 -> unmasked lane-dense stores)


def decoder_kernel(x_ref, wt_ref, b_ref, o_ref):
    # x_ref : [TB, LATENT]   (VMEM)
    # wt_ref: [LATENT, F]    (VMEM)  -- weight pre-transposed, lane-dense rows
    # b_ref : [1, F]         (VMEM)
    # o_ref : [TB, F]        (VMEM)  -- lane-dense output slab
    x = x_ref[...].astype(jnp.float32)    # [TB, LATENT]
    wt = wt_ref[...].astype(jnp.float32)  # [LATENT, F]

    # VPU FMA expansion over the tiny K dim (unrolled; LATENT is static = 2).
    # y[b, f] = sum_k x[b, k] * wt[k, f] + bias[f]
    y = jnp.broadcast_to(b_ref[...].astype(jnp.float32), o_ref.shape)
    for k in range(LATENT):
        y = y + x[:, k:k + 1] * wt[k:k + 1, :]

    # tanh in f32 (EUP), cast only at the store.
    o_ref[...] = jnp.tanh(y).astype(o_ref.dtype)


def _pick_batch_tile(batch):
    # Largest 8-aligned tile (<=1024) that evenly divides the batch; otherwise
    # fall back to a single full-extent block (legal since block == full dim).
    for tb in (1024, 512, 256, 128, 64, 32, 16, 8):
        if batch % tb == 0:
            return tb
    return batch


def cifar10_decoder1(x, weight_t, bias_row):
    """Fused Linear(2 -> c*h*w) + Tanh + Unflatten.

    x:        [B, LATENT]      f32
    weight_t: [LATENT, F]      f32  (PyTorch weight.T, pre-transposed ONCE)
    bias_row: [1, F]           f32  (bias pre-reshaped ONCE)
    returns:  [B, C, H, W]     f32
    """
    B = x.shape[0]
    assert x.shape[1] == LATENT
    assert weight_t.shape == (LATENT, FEATURES)
    assert bias_row.shape == (1, FEATURES)

    tb = _pick_batch_tile(B)
    grid = (B // tb,)

    out_flat = pl.pallas_call(
        decoder_kernel,
        out_shape=jax.ShapeDtypeStruct((B, FEATURES), jnp.float32),
        grid=grid,
        in_specs=[
            pl.BlockSpec((tb, LATENT), lambda i: (i, 0)),
            pl.BlockSpec((LATENT, FEATURES), lambda i: (0, 0)),
            pl.BlockSpec((1, FEATURES), lambda i: (0, 0)),
        ],
        out_specs=pl.BlockSpec((tb, FEATURES), lambda i: (i, 0)),
        compiler_params=pltpu.CompilerParams(
            dimension_semantics=("parallel",),
        ),
    )(x, weight_t, bias_row)

    # nn.Unflatten(-1, (c, h, w)) -> NCHW (contiguous, no data movement).
    return out_flat.reshape(B, C, H, W)


if __name__ == "__main__":
    key = jax.random.PRNGKey(0)
    k_x, k_w, k_b = jax.random.split(key, 3)

    B = 2
    x = jax.random.normal(k_x, (B, LATENT), dtype=jnp.float32)

    # Deterministic synthetic parameters (PyTorch Linear shapes: W [F, L], b [F]).
    bound = 1.0 / (LATENT ** 0.5)
    weight = jax.random.uniform(k_w, (FEATURES, LATENT), jnp.float32, -bound, bound)
    bias = jax.random.uniform(k_b, (FEATURES,), jnp.float32, -bound, bound)

    # One-time parameter layout prep (hoisted out of the per-call path).
    weight_t = jnp.asarray(weight.T)            # [LATENT, FEATURES]
    bias_row = jnp.asarray(bias.reshape(1, FEATURES))

    out = cifar10_decoder1(x, weight_t, bias_row)
    out = jax.block_until_ready(out)

    # Sanity check against plain-JAX reference of the same math.
    ref = jnp.tanh(x @ weight.T + bias).reshape(B, C, H, W)
    assert out.shape == (B, C, H, W)
    assert jnp.allclose(out, ref, atol=1e-5, rtol=1e-5)

    print("KERNEL_OK")
</pallas_src>

<mosaic_0001>
module attributes {stable_mosaic.version = 11 : i64} {
  func.func @decoder_kernel(%arg0: i32, %arg1: memref<2x2xf32, #tpu.memory_space<vmem>>, %arg2: memref<2x256xf32, #tpu.memory_space<vmem>>, %arg3: memref<1x256xf32, #tpu.memory_space<vmem>>, %arg4: memref<2x256xf32, #tpu.memory_space<vmem>>) attributes {dimension_semantics = [#tpu.dimension_semantics<parallel>], iteration_bounds = array<i64: 1>, scalar_prefetch = 0 : i64, scratch_operands = 0 : i64, tpu.core_type = #tpu.core_type<tc>, window_params = [{transform_indices = @transform_0, window_bounds = array<i64: 2, 2>}, {pipeline_mode = #tpu.pipeline_mode<synchronous>, transform_indices = @transform_1, window_bounds = array<i64: 2, 256>}, {pipeline_mode = #tpu.pipeline_mode<synchronous>, transform_indices = @transform_2, window_bounds = array<i64: 1, 256>}, {transform_indices = @transform_3, window_bounds = array<i64: 2, 256>}]} {
    %c0 = arith.constant 0 : index
    %c0_0 = arith.constant 0 : index
    %0 = vector.load %arg1[%c0, %c0_0] : memref<2x2xf32, #tpu.memory_space<vmem>>, vector<2x2xf32>
    %c0_1 = arith.constant 0 : index
    %c0_2 = arith.constant 0 : index
    %1 = vector.load %arg2[%c0_1, %c0_2] : memref<2x256xf32, #tpu.memory_space<vmem>>, vector<2x256xf32>
    %c0_3 = arith.constant 0 : index
    %c0_4 = arith.constant 0 : index
    %2 = vector.load %arg3[%c0_3, %c0_4] : memref<1x256xf32, #tpu.memory_space<vmem>>, vector<1x256xf32>
    %3 = vector.shape_cast %2 : vector<1x256xf32> to vector<1x256xf32>
    %4 = vector.broadcast %3 : vector<1x256xf32> to vector<2x256xf32>
    %5 = vector.extract_strided_slice %0 {offsets = [0, 0], sizes = [2, 1], strides = [1, 1]} : vector<2x2xf32> to vector<2x1xf32>
    %6 = vector.extract_strided_slice %1 {offsets = [0, 0], sizes = [1, 256], strides = [1, 1]} : vector<2x256xf32> to vector<1x256xf32>
    %7 = vector.broadcast %5 : vector<2x1xf32> to vector<2x256xf32>
    %8 = vector.broadcast %6 : vector<1x256xf32> to vector<2x256xf32>
    %9 = arith.mulf %7, %8 : vector<2x256xf32>
    %10 = arith.addf %4, %9 : vector<2x256xf32>
    %11 = vector.extract_strided_slice %0 {offsets = [0, 1], sizes = [2, 1], strides = [1, 1]} : vector<2x2xf32> to vector<2x1xf32>
    %12 = vector.extract_strided_slice %1 {offsets = [1, 0], sizes = [1, 256], strides = [1, 1]} : vector<2x256xf32> to vector<1x256xf32>
    %13 = vector.broadcast %11 : vector<2x1xf32> to vector<2x256xf32>
    %14 = vector.broadcast %12 : vector<1x256xf32> to vector<2x256xf32>
    %15 = arith.mulf %13, %14 : vector<2x256xf32>
    %16 = arith.addf %10, %15 : vector<2x256xf32>
    %17 = math.tanh %16 : vector<2x256xf32>
    %c0_5 = arith.constant 0 : index
    %c0_6 = arith.constant 0 : index
    %18 = vector.load %arg4[%c0_5, %c0_6] : memref<2x256xf32, #tpu.memory_space<vmem>>, vector<2x256xf32>
    tpu.vector_store %arg4[%c0_5, %c0_6], %17 {strides = array<i32>} : memref<2x256xf32, #tpu.memory_space<vmem>>, vector<2x256xf32>,
    return
  }
  func.func @transform_0(%arg0: i32) -> (i32, i32) {
    %c0_i32 = arith.constant 0 : i32
    %c0_i32_0 = arith.constant 0 : i32
    return %arg0, %c0_i32 : i32, i32
  }
  func.func @transform_1(%arg0: i32) -> (i32, i32) {
    %c0_i32 = arith.constant 0 : i32
    %c0_i32_0 = arith.constant 0 : i32
    %c0_i32_1 = arith.constant 0 : i32
    return %c0_i32, %c0_i32_0 : i32, i32
  }
  func.func @transform_2(%arg0: i32) -> (i32, i32) {
    %c0_i32 = arith.constant 0 : i32
    %c0_i32_0 = arith.constant 0 : i32
    %c0_i32_1 = arith.constant 0 : i32
    return %c0_i32, %c0_i32_0 : i32, i32
  }
  func.func @transform_3(%arg0: i32) -> (i32, i32) {
    %c0_i32 = arith.constant 0 : i32
    %c0_i32_0 = arith.constant 0 : i32
    return %arg0, %c0_i32 : i32, i32
  }
}

</mosaic_0001>

<llo_original>
// kernel: tpu_custom_call.1
$region0: #{tpu_custom_call.1}
  #allocation0 [shape = 'u32[]', space=smem, size = 0x4, offset = 0x4, fixed_abs, tag = 'smem constant byte address 0x4 - core index']
  #allocation1 [shape = 'u32[144,128]{1,0:T(1,128)}', space=vmem, size = 0x12000, scoped, tag = 'internal scratch']
  %s0 = inlined_call_operand.hbm [shape: f32[2,2], index: 0, kind: input, shape index: {}]
  %s1 = inlined_call_operand.hbm [shape: f32[2,256], index: 1, kind: input, shape index: {}]
  %s2 = inlined_call_operand.vmem [shape: f32[1,256], index: 2, kind: input, shape index: {}]
  %s3 = inlined_call_operand.hbm [shape: f32[2,256], index: 3, kind: output, shape index: {}]
  %s4 = sld [smem:[#allocation0]]
  $region30: #{tpu_custom_call.1} parent=0
    _
  %s6 = ssub.s32 1, %s4
  %s7 = scalar_select 0, %s6, %s4
  $region1: #{tpu_custom_call.1} parent=0
    #allocation2 [shape = 'u8[1024]{0}', space=vmem, size = 0x400, scoped, tag = 'input window, operand 0, single buffered']
    #allocation3 [shape = 's32[1]{0}', space=sflag, size = 0x4, scoped, tag = 'scoped memory for tpu_custom_call.1']
    #allocation4 [shape = 's32[1]{0}', space=sflag, size = 0x4, scoped, tag = 'scoped memory for tpu_custom_call.1']
    #allocation5 [shape = 'u8[2048]{0}', space=vmem, size = 0x800, scoped, tag = 'input window, operand 1, single buffered']
    #allocation6 [shape = 's32[1]{0}', space=sflag, size = 0x4, scoped, tag = 'scoped memory for tpu_custom_call.1']
    #allocation7 [shape = 'u8[2048]{0}', space=vmem, size = 0x800, scoped, tag = 'output window, operand 0, single buffered']
    %8 = vsyncpa [#allocation3], 0
    %9 = vsyncpa [#allocation6], 0
    %10 = vsyncpa [#allocation4], 0
    // Predicated region
    $region2: #{tpu_custom_call.1} parent=1 // pred_check
      _
    $region3: #{tpu_custom_call.1} parent=1 // pred_check_branch
      %12 = sbr.rel (0) target = $region5
    $region4: #{tpu_custom_call.1} parent=1 // pred_region
      %s14 = ssub.s32 32, 32
      %15 = vsyncadd [#allocation3], %s14
      %s17 = sshll.u32 [#allocation2], 4
      %s18 = int_to_ptr.vmem [resolvable:$true] %s17
      %20 = dma.hbm_to_vmem [thread:$0]  %s0, 32, %s18, [#allocation3]
    $region5: #{tpu_custom_call.1} parent=1 // pred_fallthru
      _
    // Predicated region
    $region6: #{tpu_custom_call.1} parent=1 // pred_check
      _
    $region7: #{tpu_custom_call.1} parent=1 // pred_check_branch
      %22 = sbr.rel (0) target = $region9
    $region8: #{tpu_custom_call.1} parent=1 // pred_region
      %s24 = ssub.s32 64, 64
      %25 = vsyncadd [#allocation6], %s24
      %s27 = sshll.u32 [#allocation5], 4
      %s28 = int_to_ptr.vmem [resolvable:$true] %s27
      %30 = dma.hbm_to_vmem [thread:$0]  %s1, 64, %s28, [#allocation6]
    $region9: #{tpu_custom_call.1} parent=1 // pred_fallthru
      _
    // Predicated region
    $region10: #{tpu_custom_call.1} parent=1 // pred_check
      _
    $region11: #{tpu_custom_call.1} parent=1 // pred_check_branch
      %32 = sbr.rel (0) target = $region13
    $region12: #{tpu_custom_call.1} parent=1 // pred_region
      _
    $region13: #{tpu_custom_call.1} parent=1 // pred_fallthru
      _
    // Predicated region
    $region14: #{tpu_custom_call.1} parent=1 // pred_check
      _
    $region15: #{tpu_custom_call.1} parent=1 // pred_check_branch
      %34 = sbr.rel (0) target = $region17
    $region16: #{tpu_custom_call.1} parent=1 // pred_region
      %35 = dma.done [#allocation3], 32
    $region17: #{tpu_custom_call.1} parent=1 // pred_fallthru
      _
    // Predicated region
    $region18: #{tpu_custom_call.1} parent=1 // pred_check
      _
    $region19: #{tpu_custom_call.1} parent=1 // pred_check_branch
      %37 = sbr.rel (0) target = $region21
    $region20: #{tpu_custom_call.1} parent=1 // pred_region
      %38 = dma.done [#allocation6], 64
    $region21: #{tpu_custom_call.1} parent=1 // pred_fallthru
      _
    %v39 = vld [vmem:[#allocation2] sm:$0x3]
    %v40 = vld [vmem:[#allocation5] sm:$0xf]
    %v41 = vld [vmem:[%s2] sm:$0x3]
    %v43 = vlaneseq
    %v44 = vshrl.u32 %v43, 7
    %v45 = vsub.s32 0, %v44
    %v46 = vrot.slane %v41, %v45
    %v47 = vlaneseq
    %v48 = vshrl.u32 %v47, 7
    %v49 = vsub.s32 1, %v48
    %v50 = vrot.slane %v41, %v49
    %54 = vset.pattern.permute.xlu0 0
    %55 = vperm.xlu0 %54, %v39
    %v56 = vpop.permute.xlu0 %55
    %v59 = vlaneseq
    %v60 = vshrl.u32 %v59, 7
    %v61 = vsub.s32 0, %v60
    %v62 = vrot.slane %v40, %v61
    %v63 = vlaneseq
    %v64 = vshrl.u32 %v63, 7
    %v65 = vsub.s32 2, %v64
    %v66 = vrot.slane %v40, %v65
    %v69 = vlaneseq
    %v70 = vshrl.u32 %v69, 7
    %v71 = vsub.s32 0, %v70
    %v72 = vrot.slane %v62, %v71
    %v73 = vlaneseq
    %v74 = vshrl.u32 %v73, 7
    %v75 = vsub.s32 0, %v74
    %v76 = vrot.slane %v66, %v75
    %v77 = vmul.f32 %v56, %v72
    %v78 = vmul.f32 %v56, %v76
    %v79 = vadd.f32 %v46, %v77
    %v80 = vadd.f32 %v50, %v78
    %81 = vset.pattern.permute.xlu0 1
    %82 = vperm.xlu0 %81, %v39
    %v83 = vpop.permute.xlu0 %82
    %v85 = vlaneseq
    %v86 = vshrl.u32 %v85, 7
    %v87 = vsub.s32 1, %v86
    %v88 = vrot.slane %v40, %v87
    %v89 = vlaneseq
    %v90 = vshrl.u32 %v89, 7
    %v91 = vsub.s32 3, %v90
    %v92 = vrot.slane %v40, %v91
    %v95 = vlaneseq
    %v96 = vshrl.u32 %v95, 7
    %v97 = vsub.s32 1, %v96
    %v98 = vrot.slane %v88, %v97
    %v99 = vlaneseq
    %v100 = vshrl.u32 %v99, 7
    %v101 = vsub.s32 1, %v100
    %v102 = vrot.slane %v92, %v101
    %v103 = vmul.f32 %v83, %v98
    %v104 = vmul.f32 %v83, %v102
    %v105 = vadd.f32 %v79, %v103
    %v106 = vadd.f32 %v80, %v104
    %v107 = vtanh.pop %v105
    %v108 = vtanh.pop %v106
    %v111 = vcombine.low %v107, %v108
    %v113 = vunpack.c.l.s4 1983009808
    %v114 = vunpack.c.0.s8 %v113
    %v115 = vlaneseq
    %v116 = vshrl.u32 %v115, 7
    %v117 = vsub.s32 %v114, %v116
    %v118 = vrot.slane %v111, %v117
    %120 = vst [vmem:[#allocation7] sm:$0xf] %v118
    // Predicated region
    $region22: #{tpu_custom_call.1} parent=1 // pred_check
      _
    $region23: #{tpu_custom_call.1} parent=1 // pred_check_branch
      %122 = sbr.rel (0) target = $region25
    $region24: #{tpu_custom_call.1} parent=1 // pred_region
      %s124 = ssub.s32 64, 64
      %125 = vsyncadd [#allocation4], %s124
      %s127 = sshll.u32 [#allocation7], 4
      %s128 = int_to_ptr.vmem [resolvable:$true] %s127
      %130 = dma.vmem_to_hbm [thread:$0]  %s128, 64, %s3, [#allocation4]
    $region25: #{tpu_custom_call.1} parent=1 // pred_fallthru
      _
    // Predicated region
    $region26: #{tpu_custom_call.1} parent=1 // pred_check
      _
    $region27: #{tpu_custom_call.1} parent=1 // pred_check_branch
      %132 = sbr.rel (0) target = $region29
    $region28: #{tpu_custom_call.1} parent=1 // pred_region
      %133 = dma.done [#allocation4], 64
    $region29: #{tpu_custom_call.1} parent=1 // pred_fallthru
      _
    %134 = vsyncpa [#allocation3], 1
    %135 = vsyncpa [#allocation6], 1
    %136 = vsyncpa [#allocation4], 1

</llo_original>
